<compile_context>
chip_gen: v6e
topology: v6e:2x2x1
jax: 0.10.0
libtpu: 0.0.40
codegen_flags: <defaults>
</compile_context>

<pallas_src>
import jax
import jax.numpy as jnp
from jax.experimental import pallas as pl
from jax.experimental.pallas import tpu as pltpu


def _transition_kernel(x_ref, scale_ref, shift_ref, w_ref, o_ref):
    # x_ref     : (tile_hp, 2, Wp, 2*Cin)  activations (f32 or bf16)
    # scale_ref : (1, 2*Cin) f32 folded BN scale (per-channel pattern tiled x2)
    # shift_ref : (1, 2*Cin) f32 folded BN shift
    # w_ref     : (2*Cin, Cp)   0.25 * conv1x1 weight, duplicated over the pooled column pair
    # o_ref     : (tile_hp*Wp, Cp)
    x = x_ref[...].astype(jnp.float32)
    # BatchNorm (eval) + ReLU on dense (Wp, 2*Cin) vregs (VPU, f32).
    z = jnp.maximum(x * scale_ref[...] + shift_ref[...], 0.0)
    # 2x2 pool, row half: add the two pooling rows (leading-dim add -> plain VPU adds).
    zr = z[:, 0] + z[:, 1]                              # (tile_hp, Wp, 2*Cin)
    # Flatten pooled pixels; layout no-op when Wp % 8 == 0 (wrapper keeps tiles aligned).
    zr = zr.reshape(-1, zr.shape[-1])                   # (tile_hp*Wp, 2*Cin)
    w = w_ref[...]
    # 1x1 conv (+ the column half of the pool, folded into the 2*Cin contraction) on the MXU.
    o = jnp.dot(zr.astype(w.dtype), w, preferred_element_type=jnp.float32)
    o_ref[...] = o.astype(o_ref.dtype)


def _pick_tile_hp(Hp, Wp, c2, itemsize, target_block_bytes=2 << 20):
    """Largest divisor of Hp giving a few-MiB x block, sublane-aligned output tiles,
    and (when possible) >= 2 grid steps along Hp for pipelining / megacore."""
    divisors = [t for t in range(1, Hp + 1) if Hp % t == 0]
    ok = [t for t in divisors
          if t * 2 * Wp * c2 * itemsize <= target_block_bytes
          and ((t * Wp) % 8 == 0 or t == Hp)]
    if not ok:
        return Hp  # full-extent fallback always satisfies BlockSpec constraints
    multi = [t for t in ok if Hp // t >= 2]
    return max(multi) if multi else max(ok)


def transition_forward(x_nchw, gamma, beta, run_mean, run_var, conv_w,
                       eps=1e-5, compute_dtype=None, tile_hp=None):
    """Pallas implementation of _Transition.forward (eval-mode BN).

    x_nchw : (N, Cin, H, W)
    conv_w : (Cout, Cin, 1, 1)
    compute_dtype : None -> keep x dtype; jnp.bfloat16 halves HBM traffic and uses the
                    bf16 MXU path (BN/ReLU + accumulation remain f32).
    returns: (N, Cout, H//2, W//2)
    """
    N, Cin, H, W = x_nchw.shape
    Cout = conv_w.shape[0]
    Hp, Wp = H // 2, W // 2
    P = Hp * Wp
    c2 = 2 * Cin
    out_dtype = x_nchw.dtype
    act_dtype = out_dtype if compute_dtype is None else compute_dtype

    # ---- glue (one HBM pass): NCHW -> NHWC; everything after is a free reshape ----
    x = jnp.transpose(x_nchw, (0, 2, 3, 1))          # (N, H, W, Cin)
    x = x[:, :2 * Hp, :2 * Wp, :]                    # AvgPool2d floor behaviour for odd H/W
    x = x.reshape(N, Hp, 2, Wp, c2)                  # pool rows -> leading dim, pool cols -> lanes
    if act_dtype != x.dtype:
        x = x.astype(act_dtype)

    # ---- fold BN into per-channel scale/shift (tiled x2 to match the merged lane dim) ----
    inv_std = 1.0 / jnp.sqrt(run_var.astype(jnp.float32) + eps)
    scale = gamma.astype(jnp.float32) * inv_std
    shift = beta.astype(jnp.float32) - run_mean.astype(jnp.float32) * scale
    scale2 = jnp.concatenate([scale, scale]).reshape(1, c2)
    shift2 = jnp.concatenate([shift, shift]).reshape(1, c2)

    # ---- conv weight: (Cin, Cout), duplicated over the pooled column pair, 0.25 folded,
    #      output channels padded to a lane-dense multiple of 128 ----
    w_mat = conv_w.reshape(Cout, Cin).T.astype(jnp.float32)
    w2 = 0.25 * jnp.concatenate([w_mat, w_mat], axis=0)   # (2*Cin, Cout)
    Cp = ((Cout + 127) // 128) * 128
    if Cp != Cout:
        w2 = jnp.pad(w2, ((0, 0), (0, Cp - Cout)))
    w2 = w2.astype(act_dtype)

    if tile_hp is None:
        tile_hp = _pick_tile_hp(Hp, Wp, c2, jnp.dtype(act_dtype).itemsize)
    assert Hp % tile_hp == 0, (Hp, tile_hp)
    tile_p = tile_hp * Wp

    out = pl.pallas_call(
        _transition_kernel,
        out_shape=jax.ShapeDtypeStruct((N, P, Cp), out_dtype),
        grid=(N, Hp // tile_hp),
        in_specs=[
            pl.BlockSpec((None, tile_hp, 2, Wp, c2), lambda n, h: (n, h, 0, 0, 0)),
            pl.BlockSpec((1, c2), lambda n, h: (0, 0)),
            pl.BlockSpec((1, c2), lambda n, h: (0, 0)),
            pl.BlockSpec((c2, Cp), lambda n, h: (0, 0)),
        ],
        out_specs=pl.BlockSpec((None, tile_p, Cp), lambda n, h: (n, h, 0)),
        compiler_params=pltpu.CompilerParams(
            dimension_semantics=("parallel", "parallel")),
    )(x, scale2, shift2, w2)

    # ---- glue: drop channel padding, back to NCHW ----
    out = out[:, :, :Cout].reshape(N, Hp, Wp, Cout)
    return jnp.transpose(out, (0, 3, 1, 2))


def transition_reference(x, gamma, beta, run_mean, run_var, conv_w, eps=1e-5):
    """Pure-JAX reference in PyTorch op order: BN -> ReLU -> conv1x1 -> avgpool2."""
    Cin = x.shape[1]
    Cout = conv_w.shape[0]
    xn = (x - run_mean[None, :, None, None]) / jnp.sqrt(run_var[None, :, None, None] + eps)
    xn = xn * gamma[None, :, None, None] + beta[None, :, None, None]
    z = jnp.maximum(xn, 0.0)
    y = jnp.einsum('oc,nchw->nohw', conv_w.reshape(Cout, Cin), z)
    N, Co, H, W = y.shape
    return y.reshape(N, Co, H // 2, 2, W // 2, 2).mean(axis=(3, 5))


if __name__ == "__main__":
    # Small shapes consistent with the module: batch=2, in_channels=8, out_channels=4, 16x16 spatial.
    N, Cin, Cout, H, W = 2, 8, 4, 16, 16

    key = jax.random.PRNGKey(0)
    kx, kg, kb, km, kv, kw = jax.random.split(key, 6)

    x = jax.random.normal(kx, (N, Cin, H, W), dtype=jnp.float32)

    # Deterministic synthetic parameters (BatchNorm affine + running stats, conv weight).
    # TODO(synk): PyTorch's freshly-constructed module in train() mode normalizes with batch
    # statistics; this kernel implements standard eval-mode BN (running stats).
    gamma = 1.0 + 0.1 * jax.random.normal(kg, (Cin,), dtype=jnp.float32)
    beta = 0.1 * jax.random.normal(kb, (Cin,), dtype=jnp.float32)
    run_mean = 0.1 * jax.random.normal(km, (Cin,), dtype=jnp.float32)
    run_var = jax.random.uniform(kv, (Cin,), minval=0.5, maxval=1.5, dtype=jnp.float32)
    conv_w = (jax.random.normal(kw, (Cout, Cin, 1, 1), dtype=jnp.float32)
              * (1.0 / jnp.sqrt(Cin)))

    ref = transition_reference(x, gamma, beta, run_mean, run_var, conv_w)

    # f32 path (matches the PyTorch-order reference tightly).
    out = jax.block_until_ready(
        transition_forward(x, gamma, beta, run_mean, run_var, conv_w))
    assert out.shape == (N, Cout, H // 2, W // 2), out.shape
    assert jnp.allclose(out, ref, rtol=1e-4, atol=1e-5), float(jnp.max(jnp.abs(out - ref)))

    # bf16 activation/weight path (v6e/v5e HBM + MXU optimization); BN/ReLU and the
    # matmul accumulator stay f32, so only bf16 quantization error remains.
    out_bf16 = jax.block_until_ready(
        transition_forward(x, gamma, beta, run_mean, run_var, conv_w,
                           compute_dtype=jnp.bfloat16))
    assert out_bf16.shape == (N, Cout, H // 2, W // 2)
    assert jnp.allclose(out_bf16, ref, rtol=1e-1, atol=1e-1), \
        float(jnp.max(jnp.abs(out_bf16 - ref)))

    print("KERNEL_OK")
</pallas_src>

<mosaic_0001>
module attributes {stable_mosaic.version = 11 : i64} {
  func.func @_transition_kernel(%arg0: i32, %arg1: i32, %arg2: memref<1x4x2x8x16xf32, #tpu.memory_space<vmem>>, %arg3: memref<1x16xf32, #tpu.memory_space<vmem>>, %arg4: memref<1x16xf32, #tpu.memory_space<vmem>>, %arg5: memref<16x128xf32, #tpu.memory_space<vmem>>, %arg6: memref<1x32x128xf32, #tpu.memory_space<vmem>>) attributes {dimension_semantics = [#tpu.dimension_semantics<parallel>, #tpu.dimension_semantics<parallel>], iteration_bounds = array<i64: 2, 2>, scalar_prefetch = 0 : i64, scratch_operands = 0 : i64, tpu.core_type = #tpu.core_type<tc>, window_params = [{transform_indices = @transform_0, window_bounds = array<i64: 1, 4, 2, 8, 16>}, {pipeline_mode = #tpu.pipeline_mode<synchronous>, transform_indices = @transform_1, window_bounds = array<i64: 1, 16>}, {pipeline_mode = #tpu.pipeline_mode<synchronous>, transform_indices = @transform_2, window_bounds = array<i64: 1, 16>}, {pipeline_mode = #tpu.pipeline_mode<synchronous>, transform_indices = @transform_3, window_bounds = array<i64: 16, 128>}, {transform_indices = @transform_4, window_bounds = array<i64: 1, 32, 128>}]} {
    %c0 = arith.constant 0 : index
    %c0_0 = arith.constant 0 : index
    %c0_1 = arith.constant 0 : index
    %c0_2 = arith.constant 0 : index
    %c0_3 = arith.constant 0 : index
    %0 = vector.load %arg2[%c0, %c0_0, %c0_1, %c0_2, %c0_3] : memref<1x4x2x8x16xf32, #tpu.memory_space<vmem>>, vector<1x4x2x8x16xf32>
    %1 = vector.shape_cast %0 : vector<1x4x2x8x16xf32> to vector<4x2x8x16xf32>
    %c0_4 = arith.constant 0 : index
    %c0_5 = arith.constant 0 : index
    %2 = vector.load %arg3[%c0_4, %c0_5] : memref<1x16xf32, #tpu.memory_space<vmem>>, vector<1x16xf32>
    %3 = vector.shape_cast %2 : vector<1x16xf32> to vector<1x1x1x16xf32>
    %4 = vector.broadcast %3 : vector<1x1x1x16xf32> to vector<4x2x8x16xf32>
    %5 = arith.mulf %1, %4 : vector<4x2x8x16xf32>
    %c0_6 = arith.constant 0 : index
    %c0_7 = arith.constant 0 : index
    %6 = vector.load %arg4[%c0_6, %c0_7] : memref<1x16xf32, #tpu.memory_space<vmem>>, vector<1x16xf32>
    %7 = vector.shape_cast %6 : vector<1x16xf32> to vector<1x1x1x16xf32>
    %8 = vector.broadcast %7 : vector<1x1x1x16xf32> to vector<4x2x8x16xf32>
    %9 = arith.addf %5, %8 : vector<4x2x8x16xf32>
    %cst = arith.constant 0.000000e+00 : f32
    %10 = vector.broadcast %cst : f32 to vector<4x2x8x16xf32>
    %11 = arith.maximumf %9, %10 : vector<4x2x8x16xf32>
    %12 = vector.extract_strided_slice %11 {offsets = [0, 0, 0, 0], sizes = [4, 1, 8, 16], strides = [1, 1, 1, 1]} : vector<4x2x8x16xf32> to vector<4x1x8x16xf32>
    %13 = vector.shape_cast %12 : vector<4x1x8x16xf32> to vector<4x8x16xf32>
    %14 = vector.extract_strided_slice %11 {offsets = [0, 1, 0, 0], sizes = [4, 1, 8, 16], strides = [1, 1, 1, 1]} : vector<4x2x8x16xf32> to vector<4x1x8x16xf32>
    %15 = vector.shape_cast %14 : vector<4x1x8x16xf32> to vector<4x8x16xf32>
    %16 = arith.addf %13, %15 : vector<4x8x16xf32>
    %17 = vector.shape_cast %16 : vector<4x8x16xf32> to vector<32x16xf32>
    %c0_8 = arith.constant 0 : index
    %c0_9 = arith.constant 0 : index
    %18 = vector.load %arg5[%c0_8, %c0_9] : memref<16x128xf32, #tpu.memory_space<vmem>>, vector<16x128xf32>
    %cst_10 = arith.constant dense<0.000000e+00> : vector<32x128xf32>
    %19 = tpu.matmul %17, %18, %cst_10 {dimension_numbers = #tpu.dot_dimension_numbers<[1], [0], [0], [1], [0, 0, 1, 1], [], []>} : vector<32x16xf32>, vector<16x128xf32>, vector<32x128xf32> -> vector<32x128xf32>
    %c0_11 = arith.constant 0 : index
    %c0_12 = arith.constant 0 : index
    %c0_13 = arith.constant 0 : index
    %20 = vector.load %arg6[%c0_11, %c0_12, %c0_13] : memref<1x32x128xf32, #tpu.memory_space<vmem>>, vector<1x32x128xf32>
    %21 = vector.shape_cast %20 : vector<1x32x128xf32> to vector<32x128xf32>
    %22 = vector.shape_cast %19 : vector<32x128xf32> to vector<1x32x128xf32>
    tpu.vector_store %arg6[%c0_11, %c0_12, %c0_13], %22 {strides = array<i32>} : memref<1x32x128xf32, #tpu.memory_space<vmem>>, vector<1x32x128xf32>,
    return
  }
  func.func @transform_0(%arg0: i32, %arg1: i32) -> (i32, i32, i32, i32, i32) {
    %c0_i32 = arith.constant 0 : i32
    %c0_i32_0 = arith.constant 0 : i32
    %c0_i32_1 = arith.constant 0 : i32
    %c0_i32_2 = arith.constant 0 : i32
    return %arg0, %arg1, %c0_i32, %c0_i32_0, %c0_i32_1 : i32, i32, i32, i32, i32
  }
  func.func @transform_1(%arg0: i32, %arg1: i32) -> (i32, i32) {
    %c0_i32 = arith.constant 0 : i32
    %c0_i32_0 = arith.constant 0 : i32
    %c0_i32_1 = arith.constant 0 : i32
    return %c0_i32, %c0_i32_0 : i32, i32
  }
  func.func @transform_2(%arg0: i32, %arg1: i32) -> (i32, i32) {
    %c0_i32 = arith.constant 0 : i32
    %c0_i32_0 = arith.constant 0 : i32
    %c0_i32_1 = arith.constant 0 : i32
    return %c0_i32, %c0_i32_0 : i32, i32
  }
  func.func @transform_3(%arg0: i32, %arg1: i32) -> (i32, i32) {
    %c0_i32 = arith.constant 0 : i32
    %c0_i32_0 = arith.constant 0 : i32
    %c0_i32_1 = arith.constant 0 : i32
    return %c0_i32, %c0_i32_0 : i32, i32
  }
  func.func @transform_4(%arg0: i32, %arg1: i32) -> (i32, i32, i32) {
    %c0_i32 = arith.constant 0 : i32
    %c0_i32_0 = arith.constant 0 : i32
    return %arg0, %arg1, %c0_i32 : i32, i32, i32
  }
}

</mosaic_0001>

<llo_original>
// kernel: tpu_custom_call.1
$region0: #{tpu_custom_call.1}
  #allocation0 [shape = 'u32[]', space=smem, size = 0x4, offset = 0x4, fixed_abs, tag = 'smem constant byte address 0x4 - core index']
  #allocation1 [shape = 'u32[144,128]{1,0:T(1,128)}', space=vmem, size = 0x12000, scoped, tag = 'internal scratch']
  %s0 = inlined_call_operand.hbm [shape: f32[2,8,2,8,16], index: 0, kind: input, shape index: {}]
  %s1 = inlined_call_operand.vmem [shape: f32[1,16], index: 1, kind: input, shape index: {}]
  %s2 = inlined_call_operand.vmem [shape: f32[1,16], index: 2, kind: input, shape index: {}]
  %s3 = inlined_call_operand.hbm [shape: f32[16,128], index: 3, kind: input, shape index: {}]
  %s4 = inlined_call_operand.hbm [shape: f32[2,64,128], index: 4, kind: output, shape index: {}]
  %s5 = sld [smem:[#allocation0]]
  $region57: #{tpu_custom_call.1} parent=0
    _
  %s7 = ssub.s32 1, %s5
  %s8 = scalar_select 0, %s7, %s5
  $region1: #{tpu_custom_call.1} parent=0
    #allocation2 [shape = 'u8[65536]{0}', space=vmem, size = 0x10000, scoped, tag = 'input window, operand 0']
    #allocation3 [shape = 's32[2]{0}', space=sflag, size = 0x8, scoped, tag = 'scoped memory for tpu_custom_call.1']
    #allocation4 [shape = 's32[2]{0}', space=sflag, size = 0x8, scoped, tag = 'scoped memory for tpu_custom_call.1']
    #allocation5 [shape = 'u8[8192]{0}', space=vmem, size = 0x2000, scoped, tag = 'input window, operand 3, single buffered']
    #allocation6 [shape = 's32[1]{0}', space=sflag, size = 0x4, scoped, tag = 'scoped memory for tpu_custom_call.1']
    #allocation7 [shape = 'u8[32768]{0}', space=vmem, size = 0x8000, scoped, tag = 'output window, operand 0']
    %9 = vsyncpa [#allocation3], 0
    %s10 = scalar_lea.sflag [#allocation3], 1
    %11 = vsyncpa %s10, 0
    %12 = vsyncpa [#allocation6], 0
    %13 = vsyncpa [#allocation4], 0
    %s14 = scalar_lea.sflag [#allocation4], 1
    %15 = vsyncpa %s14, 0
    loop: start=0, step=1, limit=6
    $region2: #{tpu_custom_call.1} parent=1 // loop_pre_header
      _
    $region3: #{tpu_custom_call.1} parent=1 // loop_header
      %s17 = sphi 0, %s21
      %p18 = scmp.ge.s32.totalorder %s17, 6
      %s24 = sphi 0, %s36
      %s25 = sphi 0, %s32
      %s26 = sphi 0, %s24
      %s27 = sphi 0, %s25
      %s28 = sphi 0, %s26
      %s29 = sphi 0, %s27
      %s41 = sphi 0, %s43
      %s44 = sphi 0, %s41
      %s45 = sphi 0, %s44
      %s61 = sphi 0, %s45
      %s65 = sphi 0, %s65
      %s67 = sphi 0, %s65
      %s68 = sphi 0, %s67
      %s82 = sphi 0, %s68
      %s86 = sphi 0, %s86
      %s88 = sphi 0, %s86
      %s89 = sphi 0, %s88
      %s103 = sphi 0, %s89
      %s107 = sphi 0, %s107
      %s109 = sphi 0, %s107
      %s110 = sphi 0, %s109
      %s124 = sphi 0, %s110
      %s132 = sphi 0, %s134
      %s135 = sphi 0, %s132
      %s136 = sphi 0, %s135
      %s152 = sphi 0, %s136
    $region4: #{tpu_custom_call.1} parent=1 // loop_header_branch
      %20 = sbr.rel (%p18) target = $region8
    $region5: #{tpu_custom_call.1} parent=1 // loop_body
      %s22 = ssub.s32 %s17, 1
      %s23 = ssub.s32 %s17, 2
      %s30 = sadd.s32 1, %s25
      %p31 = scmp.ge.s32.totalorder %s30, 2
      %s32 = scalar_select %p31, 0, %s30
      %s33 = sadd.s32 1, %s24
      %s34 = scalar_select %p31, %s33, %s24
      %p35 = scmp.ge.s32.totalorder %s34, 2
      %s36 = scalar_select %p35, 0, %s34
      %s37 = ssub.s32 %s24, %s36
      %s38 = ssub.s32 %s25, %s32
      %s39 = sor.u32 %s37, %s38
      %p40 = scmp.eq.s32.totalorder %s39, 0
      %s42 = sadd.s32 %s41, 1
      %s43 = scalar_select %p40, %s41, %s42
      %p46 = pneg %p40
      %p47 = scmp.eq.s32.totalorder %s17, 3
      %p48 = por %p46, %p47
      %p49 = scmp.ne.s32.totalorder %s41, %s44
      %p50 = scmp.eq.s32.totalorder %s17, 0
      %p51 = por %p49, %p50
      %p52 = scmp.ne.s32.totalorder %s41, %s44
      %p53 = scmp.eq.s32.totalorder %s22, 3
      %p54 = por %p52, %p53
      %p55 = scmp.ne.s32.totalorder %s44, %s45
      %p56 = scmp.eq.s32.totalorder %s22, 0
      %p57 = por %p55, %p56
      %p58 = scmp.ne.s32.totalorder %s44, %s45
      %p59 = scmp.eq.s32.totalorder %s23, 3
      %p60 = por %p58, %p59
      %p62 = scmp.ne.s32.totalorder %s45, %s61
      %p63 = scmp.eq.s32.totalorder %s23, 0
      %p64 = por %p62, %p63
      %s66 = sadd.s32 %s65, 1
      %p69 = scmp.eq.s32.totalorder %s17, 3
      %p70 = scmp.ne.s32.totalorder %s65, %s67
      %p71 = scmp.eq.s32.totalorder %s17, 0
      %p72 = por %p70, %p71
      %p73 = scmp.ne.s32.totalorder %s65, %s67
      %p74 = scmp.eq.s32.totalorder %s22, 3
      %p75 = por %p73, %p74
      %p76 = scmp.ne.s32.totalorder %s67, %s68
      %p77 = scmp.eq.s32.totalorder %s22, 0
      %p78 = por %p76, %p77
      %p79 = scmp.ne.s32.totalorder %s67, %s68
      %p80 = scmp.eq.s32.totalorder %s23, 3
      %p81 = por %p79, %p80
      %p83 = scmp.ne.s32.totalorder %s68, %s82
      %p84 = scmp.eq.s32.totalorder %s23, 0
      %p85 = por %p83, %p84
      %s87 = sadd.s32 %s86, 1
      %p90 = scmp.eq.s32.totalorder %s17, 3
      %p91 = scmp.ne.s32.totalorder %s86, %s88
      %p92 = scmp.eq.s32.totalorder %s17, 0
      %p93 = por %p91, %p92
      %p94 = scmp.ne.s32.totalorder %s86, %s88
      %p95 = scmp.eq.s32.totalorder %s22, 3
      %p96 = por %p94, %p95
      %p97 = scmp.ne.s32.totalorder %s88, %s89
      %p98 = scmp.eq.s32.totalorder %s22, 0
      %p99 = por %p97, %p98
      %p100 = scmp.ne.s32.totalorder %s88, %s89
      %p101 = scmp.eq.s32.totalorder %s23, 3
      %p102 = por %p100, %p101
      %p104 = scmp.ne.s32.totalorder %s89, %s103
      %p105 = scmp.eq.s32.totalorder %s23, 0
      %p106 = por %p104, %p105
      %s108 = sadd.s32 %s107, 1
      %p111 = scmp.eq.s32.totalorder %s17, 3
      %p112 = scmp.ne.s32.totalorder %s107, %s109
      %p113 = scmp.eq.s32.totalorder %s17, 0
      %p114 = por %p112, %p113
      %p115 = scmp.ne.s32.totalorder %s107, %s109
      %p116 = scmp.eq.s32.totalorder %s22, 3
      %p117 = por %p115, %p116
      %p118 = scmp.ne.s32.totalorder %s109, %s110
      %p119 = scmp.eq.s32.totalorder %s22, 0
      %p120 = por %p118, %p119
      %p121 = scmp.ne.s32.totalorder %s109, %s110
      %p122 = scmp.eq.s32.totalorder %s23, 3
      %p123 = por %p121, %p122
      %p125 = scmp.ne.s32.totalorder %s110, %s124
      %p126 = scmp.eq.s32.totalorder %s23, 0
      %p127 = por %p125, %p126
      %s128 = ssub.s32 %s24, %s36
      %s129 = ssub.s32 %s25, %s32
      %s130 = sor.u32 %s128, %s129
      %p131 = scmp.eq.s32.totalorder %s130, 0
      %s133 = sadd.s32 %s132, 1
      %s134 = scalar_select %p131, %s132, %s133
      %p137 = pneg %p131
      %p138 = scmp.eq.s32.totalorder %s17, 3
      %p139 = por %p137, %p138
      %p140 = scmp.ne.s32.totalorder %s132, %s135
      %p141 = scmp.eq.s32.totalorder %s17, 0
      %p142 = por %p140, %p141
      %p143 = scmp.ne.s32.totalorder %s132, %s135
      %p144 = scmp.eq.s32.totalorder %s22, 3
      %p145 = por %p143, %p144
      %p146 = scmp.ne.s32.totalorder %s135, %s136
      %p147 = scmp.eq.s32.totalorder %s22, 0
      %p148 = por %p146, %p147
      %p149 = scmp.ne.s32.totalorder %s135, %s136
      %p150 = scmp.eq.s32.totalorder %s23, 3
      %p151 = por %p149, %p150
      %p153 = scmp.ne.s32.totalorder %s136, %s152
      %p154 = scmp.eq.s32.totalorder %s23, 0
      %p155 = por %p153, %p154
      %p156 = scmp.le.s32.totalorder 1, %s17
      %p157 = scmp.lt.s32.totalorder %s17, 5
      %p158 = pnand %p156, %p157
      %p159 = pneg %p158
      // Predicated region
      $region9: #{tpu_custom_call.1} parent=5 // pred_check
        _
      $region10: #{tpu_custom_call.1} parent=5 // pred_check_branch
        %161 = sbr.rel (%p158) target = $region12
      $region11: #{tpu_custom_call.1} parent=5 // pred_region
        %s162 = ssub.s32 %s17, 1
        // Predicated region
        $region13: #{tpu_custom_call.1} parent=11 // pred_check
          %p163 = pneg %p78
        $region14: #{tpu_custom_call.1} parent=11 // pred_check_branch
          %165 = sbr.rel (%p163) target = $region16
        $region15: #{tpu_custom_call.1} parent=11 // pred_region
          _
        $region16: #{tpu_custom_call.1} parent=11 // pred_fallthru
          _
        // Predicated region
        $region17: #{tpu_custom_call.1} parent=11 // pred_check
          %p166 = pneg %p99
        $region18: #{tpu_custom_call.1} parent=11 // pred_check_branch
          %168 = sbr.rel (%p166) target = $region20
        $region19: #{tpu_custom_call.1} parent=11 // pred_region
          _
        $region20: #{tpu_custom_call.1} parent=11 // pred_fallthru
          _
        // Predicated region
        $region21: #{tpu_custom_call.1} parent=11 // pred_check
          %p169 = pneg %p120
        $region22: #{tpu_custom_call.1} parent=11 // pred_check_branch
          %171 = sbr.rel (%p169) target = $region24
        $region23: #{tpu_custom_call.1} parent=11 // pred_region
          %s173 = ssub.s32 256, 256
          %174 = vsyncadd [#allocation6], %s173
          %s175 = sshll.u32 [#allocation5], 4
          %s176 = int_to_ptr.vmem [resolvable:$true] %s175
          %181 = dma.hbm_to_vmem [thread:$0]  %s3, 256, %s176, [#allocation6], 128, 128, 8
        $region24: #{tpu_custom_call.1} parent=11 // pred_fallthru
          _
      $region12: #{tpu_custom_call.1} parent=5 // pred_fallthru
        _
      %p182 = scmp.lt.s32.totalorder %s17, 4
      // Predicated region
      $region25: #{tpu_custom_call.1} parent=5 // pred_check
        %p183 = pneg %p182
      $region26: #{tpu_custom_call.1} parent=5 // pred_check_branch
        %185 = sbr.rel (%p183) target = $region28
      $region27: #{tpu_custom_call.1} parent=5 // pred_region
        // Predicated region
        $region29: #{tpu_custom_call.1} parent=27 // pred_check
          %p186 = pneg %p51
        $region30: #{tpu_custom_call.1} parent=27 // pred_check_branch
          %188 = sbr.rel (%p186) target = $region32
        $region31: #{tpu_custom_call.1} parent=27 // pred_region
          %s189 = sand.u32 %s41, 1
          %s190 = scalar_lea.sflag [#allocation3], %s189
          %s191 = sand.u32 %s41, 1
          %s192 = smul.addr %s191, 64
          %s193 = scalar_lea.vmem [#allocation2], %s192
          %s194 = smul.u32 4, %s25
          %s196 = ssub.s32 1024, 1024
          %197 = vsyncadd %s190, %s196
          %s198 = smul.addr %s194, 2
          %s199 = smul.addr %s24, 16
          %s200 = sadd.s32 %s198, %s199
          %s201 = smul.addr %s200, 128
          %s202 = scalar_lea.hbm %s0, %s201
          %s203 = sshll.u32 %s193, 4
          %s204 = int_to_ptr.vmem [resolvable:$true] %s203
          %209 = dma.hbm_to_vmem [thread:$0]  %s202, 1024, %s204, %s190, 128, 128, 8
        $region32: #{tpu_custom_call.1} parent=27 // pred_fallthru
          _
      $region28: #{tpu_custom_call.1} parent=5 // pred_fallthru
        _
      %p210 = scmp.le.s32.totalorder 1, %s17
      %p211 = scmp.lt.s32.totalorder %s17, 5
      %p212 = pnand %p210, %p211
      %p213 = pneg %p212
      // Predicated region
      $region33: #{tpu_custom_call.1} parent=5 // pred_check
        _
      $region34: #{tpu_custom_call.1} parent=5 // pred_check_branch
        %215 = sbr.rel (%p212) target = $region36
      $region35: #{tpu_custom_call.1} parent=5 // pred_region
        %s216 = ssub.s32 %s17, 1
        %s217 = sand.u32 %s44, 1
        %s218 = scalar_lea.sflag [#allocation3], %s217
        %s219 = sand.u32 %s44, 1
        %s220 = smul.addr %s219, 64
        %s221 = scalar_lea.vmem [#allocation2], %s220
        // Predicated region
        $region37: #{tpu_custom_call.1} parent=35 // pred_check
          %p222 = pneg %p57
        $region38: #{tpu_custom_call.1} parent=35 // pred_check_branch
          %224 = sbr.rel (%p222) target = $region40
        $region39: #{tpu_custom_call.1} parent=35 // pred_region
          %225 = dma.done %s218, 1024
        $region40: #{tpu_custom_call.1} parent=35 // pred_fallthru
          _
        // Predicated region
        $region41: #{tpu_custom_call.1} parent=35 // pred_check
          %p226 = pneg %p120
        $region42: #{tpu_custom_call.1} parent=35 // pred_check_branch
          %228 = sbr.rel (%p226) target = $region44
        $region43: #{tpu_custom_call.1} parent=35 // pred_region
          %229 = dma.done [#allocation6], 256
        $region44: #{tpu_custom_call.1} parent=35 // pred_fallthru
          _
        %s230 = sand.u32 %s44, 1
        %s231 = scalar_lea.sflag [#allocation3], %s230
        %s232 = sand.u32 %s44, 1
        %s233 = smul.addr %s232, 64
        %s234 = scalar_lea.vmem [#allocation2], %s233
        %p235 = pneg %p57
        %p236 = pneg %p54
        %p237 = pneg %p78
        %p238 = pneg %p75
        %p239 = pneg %p99
        %p240 = pneg %p96
        %p241 = pneg %p120
        %p242 = pneg %p117
        %p243 = pneg %p148
        %p244 = pneg %p145
        %s245 = sand.u32 %s135, 1
        %s246 = scalar_lea.sflag [#allocation4], %s245
        %s247 = sand.u32 %s135, 1
        %s248 = smul.addr %s247, 32
        %s249 = scalar_lea.vmem [#allocation7], %s248
        %s250 = smul.u32 4, %s27
        %s251 = smul.u32 4, %s27
        %v252 = vld [vmem:[%s221] sm:$0xff]
        %v253 = vld [vmem:[%s221 + $0x8] sm:$0xff]
        %v254 = vld [vmem:[%s221 + $0x10] sm:$0xff]
        %v255 = vld [vmem:[%s221 + $0x18] sm:$0xff]
        %v256 = vld [vmem:[%s221 + $0x20] sm:$0xff]
        %v257 = vld [vmem:[%s221 + $0x28] sm:$0xff]
        %v258 = vld [vmem:[%s221 + $0x30] sm:$0xff]
        %v259 = vld [vmem:[%s221 + $0x38] sm:$0xff]
        %v260 = vld [vmem:[%s1] sm:$0x1]
        %v262 = vlaneseq
        %v263 = vshrl.u32 %v262, 7
        %v264 = vsub.s32 0, %v263
        %v265 = vrot.slane %v260, %v264
        %v267 = vmul.f32 %v252, %v265
        %v268 = vmul.f32 %v253, %v265
        %v269 = vmul.f32 %v254, %v265
        %v270 = vmul.f32 %v255, %v265
        %v271 = vmul.f32 %v256, %v265
        %v272 = vmul.f32 %v257, %v265
        %v273 = vmul.f32 %v258, %v265
        %v274 = vmul.f32 %v259, %v265
        %v275 = vld [vmem:[%s2] sm:$0x1]
        %v277 = vlaneseq
        %v278 = vshrl.u32 %v277, 7
        %v279 = vsub.s32 0, %v278
        %v280 = vrot.slane %v275, %v279
        %v282 = vadd.f32 %v267, %v280
        %v283 = vadd.f32 %v268, %v280
        %v284 = vadd.f32 %v269, %v280
        %v285 = vadd.f32 %v270, %v280
        %v286 = vadd.f32 %v271, %v280
        %v287 = vadd.f32 %v272, %v280
        %v288 = vadd.f32 %v273, %v280
        %v289 = vadd.f32 %v274, %v280
        %v290 = vmax.f32 %v282, 0.0
        %v291 = vmax.f32 %v283, 0.0
        %v292 = vmax.f32 %v284, 0.0
        %v293 = vmax.f32 %v285, 0.0
        %v294 = vmax.f32 %v286, 0.0
        %v295 = vmax.f32 %v287, 0.0
        %v296 = vmax.f32 %v288, 0.0
        %v297 = vmax.f32 %v289, 0.0
        %v298 = vadd.f32 %v290, %v291
        %v299 = vadd.f32 %v292, %v293
        %v300 = vadd.f32 %v294, %v295
        %v301 = vadd.f32 %v296, %v297
        %v302 = vld [vmem:[#allocation5] sm:$0xff]
        %v303 = vld [vmem:[#allocation5 + $0x8] sm:$0xff]
        %vm304 = vcmask 130048
        %v306 = vsel %vm304, %v298, 0
        %v309 = vsel %vm304, %v299, 0
        %v312 = vsel %vm304, %v300, 0
        %v315 = vsel %vm304, %v301, 0
        %317 = vmatprep.subr.mxu0 0.0
        %318 = vmatpush1.msra.mxu0 0.0
        %319 = vmatprep.subr.mxu0 0.0
        %320 = vmatpush1.msra.mxu0 0.0
        %321 = vmatprep.subr.mxu0 0.0
        %322 = vmatpush1.msra.mxu0 0.0
        %323 = vmatprep.subr.mxu0 0.0
        %324 = vmatpush1.msra.mxu0 0.0
        %325 = vmatprep.subr.mxu0 0.0
        %326 = vmatpush1.msra.mxu0 0.0
        %327 = vmatprep.subr.mxu0 0.0
        %328 = vmatpush1.msra.mxu0 0.0
        %329 = vmatprep.subr.mxu0 0.0
        %330 = vmatpush1.msra.mxu0 0.0
        %331 = vmatprep.subr.mxu0 0.0
        %332 = vmatpush1.msra.mxu0 0.0
        %333 = vmatprep.subr.mxu0 0.0
        %334 = vmatpush1.msra.mxu0 0.0
        %335 = vmatprep.subr.mxu0 0.0
        %336 = vmatpush1.msra.mxu0 0.0
        %337 = vmatprep.subr.mxu0 0.0
        %338 = vmatpush1.msra.mxu0 0.0
        %339 = vmatprep.subr.mxu0 0.0
        %340 = vmatpush1.msra.mxu0 0.0
        %341 = vmatprep.subr.mxu0 0.0
        %342 = vmatpush1.msra.mxu0 0.0
        %343 = vmatprep.subr.mxu0 0.0
        %344 = vmatpush1.msra.mxu0 0.0
        %345 = vmatprep.subr.mxu0 0.0
        %346 = vmatpush1.msra.mxu0 %v303
        %347 = vmatprep.subr.mxu0 0.0
        %348 = vmatpush1.msra.mxu0 %v302
        %349 = vmatprep.subr.mxu0 0.0
        %350 = vmatpush2.msra.mxu0 0.0
        %351 = vmatprep.subr.mxu0 0.0
        %352 = vmatpush2.msra.mxu0 0.0
        %353 = vmatprep.subr.mxu0 0.0
        %354 = vmatpush2.msra.mxu0 0.0
        %355 = vmatprep.subr.mxu0 0.0
        %356 = vmatpush2.msra.mxu0 0.0
        %357 = vmatprep.subr.mxu0 0.0
        %358 = vmatpush2.msra.mxu0 0.0
        %359 = vmatprep.subr.mxu0 0.0
        %360 = vmatpush2.msra.mxu0 0.0
        %361 = vmatprep.subr.mxu0 0.0
        %362 = vmatpush2.msra.mxu0 0.0
        %363 = vmatprep.subr.mxu0 0.0
        %364 = vmatpush2.msra.mxu0 0.0
        %365 = vmatprep.subr.mxu0 0.0
        %366 = vmatpush2.msra.mxu0 0.0
        %367 = vmatprep.subr.mxu0 0.0
        %368 = vmatpush2.msra.mxu0 0.0
        %369 = vmatprep.subr.mxu0 0.0
        %370 = vmatpush2.msra.mxu0 0.0
        %371 = vmatprep.subr.mxu0 0.0
        %372 = vmatpush2.msra.mxu0 0.0
        %373 = vmatprep.subr.mxu0 0.0
        %374 = vmatpush2.msra.mxu0 0.0
        %375 = vmatprep.subr.mxu0 0.0
        %376 = vmatpush2.msra.mxu0 0.0
        %377 = vmatprep.subr.mxu0 0.0
        %378 = vmatpush2.msra.mxu0 0.0
        %379 = vmatprep.subr.mxu0 0.0
        %380 = vmatpush2.msra.mxu0 0.0
        %381 = vmatprep.mubr.f32.mxu0 0.0
        %382 = vmatmul.mubr.f32.gmra.mxu0 %v306
        %v383 = vpop.f32.mrf.mxu0
        %v384 = vadd.f32 0.0, %v383
        %v385 = vpop.f32.mrf.mxu0
        %386 = vmatprep.mubr.f32.mxu0 0.0
        %387 = vmatmul.mubr.f32.gmra.mxu0 %v309
        %v388 = vpop.f32.mrf.mxu0
        %v389 = vadd.f32 0.0, %v388
        %v390 = vpop.f32.mrf.mxu0
        %391 = vmatprep.mubr.f32.mxu0 0.0
        %392 = vmatmul.mubr.f32.gmra.mxu0 %v312
        %v393 = vpop.f32.mrf.mxu0
        %v394 = vadd.f32 0.0, %v393
        %v395 = vpop.f32.mrf.mxu0
        %396 = vmatprep.mubr.f32.mxu0 0.0
        %397 = vmatmul.mubr.f32.gmra.mxu0 %v315
        %v398 = vpop.f32.mrf.mxu0
        %v399 = vadd.f32 0.0, %v398
        %v400 = vpop.f32.mrf.mxu0
        %401 = vdwg.mxu0
        %402 = vst [vmem:[%s249] sm:$0xff] %v384
        %403 = vst [vmem:[%s249 + $0x8] sm:$0xff] %v389
        %404 = vst [vmem:[%s249 + $0x10] sm:$0xff] %v394
        %405 = vst [vmem:[%s249 + $0x18] sm:$0xff] %v399
        %s406 = sand.u32 %s135, 1
        %s407 = scalar_lea.sflag [#allocation4], %s406
        %s408 = sand.u32 %s135, 1
        %s409 = smul.addr %s408, 32
        %s410 = scalar_lea.vmem [#allocation7], %s409
        // Predicated region
        $region45: #{tpu_custom_call.1} parent=35 // pred_check
          %p411 = pneg %p145
        $region46: #{tpu_custom_call.1} parent=35 // pred_check_branch
          %413 = sbr.rel (%p411) target = $region48
        $region47: #{tpu_custom_call.1} parent=35 // pred_region
          %s414 = smul.u32 4, %s27
          %s416 = ssub.s32 512, 512
          %417 = vsyncadd %s407, %s416
          %s418 = smul.addr %s26, 8
          %s419 = sadd.s32 %s414, %s418
          %s420 = smul.addr %s419, 128
          %s421 = scalar_lea.hbm %s4, %s420
          %s422 = sshll.u32 %s410, 4
          %s423 = int_to_ptr.vmem [resolvable:$true] %s422
          %428 = dma.vmem_to_hbm [thread:$0]  %s423, 512, %s421, %s407, 128, 128, 8
        $region48: #{tpu_custom_call.1} parent=35 // pred_fallthru
          _
      $region36: #{tpu_custom_call.1} parent=5 // pred_fallthru
        _
      %p429 = scmp.le.s32.totalorder 2, %s17
      // Predicated region
      $region49: #{tpu_custom_call.1} parent=5 // pred_check
        %p430 = pneg %p429
      $region50: #{tpu_custom_call.1} parent=5 // pred_check_branch
        %432 = sbr.rel (%p430) target = $region52
      $region51: #{tpu_custom_call.1} parent=5 // pred_region
        %s433 = ssub.s32 %s17, 2
        // Predicated region
        $region53: #{tpu_custom_call.1} parent=51 // pred_check
          %p434 = pneg %p151
        $region54: #{tpu_custom_call.1} parent=51 // pred_check_branch
          %436 = sbr.rel (%p434) target = $region56
        $region55: #{tpu_custom_call.1} parent=51 // pred_region
          %s437 = sand.u32 %s136, 1
          %s438 = scalar_lea.sflag [#allocation4], %s437
          %s439 = sand.u32 %s136, 1
          %s440 = smul.addr %s439, 32
          %s441 = scalar_lea.vmem [#allocation7], %s440
          %442 = dma.done %s438, 512
        $region56: #{tpu_custom_call.1} parent=51 // pred_fallthru
          _
      $region52: #{tpu_custom_call.1} parent=5 // pred_fallthru
        _
    $region6: #{tpu_custom_call.1} parent=1 // loop_footer
      %s21 = sadd.s32 1, %s17
    $region7: #{tpu_custom_call.1} parent=1 // loop_footer_branch
      %16 = sbr.rel target = $region3
    $region8: #{tpu_custom_call.1} parent=1 // loop_exit
      _
    %443 = vsyncpa [#allocation3], 1
    %s444 = scalar_lea.sflag [#allocation3], 1
    %445 = vsyncpa %s444, 1
    %446 = vsyncpa [#allocation6], 1
    %447 = vsyncpa [#allocation4], 1
    %s448 = scalar_lea.sflag [#allocation4], 1
    %449 = vsyncpa %s448, 1

</llo_original>
